<compile_context>
chip_gen: v5e
topology: v5e:2x2
jax: 0.10.0
libtpu: 0.0.40
codegen_flags: <defaults>
</compile_context>

<pallas_src>
import jax
import jax.numpy as jnp
from jax.experimental import pallas as pl
from jax.experimental.pallas import tpu as pltpu


def _round_up(n, m):
    return ((n + m - 1) // m) * m


def mlp_kernel(xT_ref, w1T_ref, b1_ref, w2T_ref, b2_ref, o_ref):
    # fc1: (8, F) bf16 @ (F, TB) bf16 -> (8, TB), f32 accumulate on the MXU.
    h = jnp.dot(w1T_ref[...], xT_ref[...], preferred_element_type=jnp.float32)
    # bias + ReLU in f32 on the VPU (b1 is (8,1): lane broadcast).
    h = jnp.maximum(h + b1_ref[...], 0.0)
    # fc2: (8, 8) f32 @ (8, TB) f32 -> (8, TB).  Tiny matmul; kept in f32 for
    # accuracy and to avoid bf16 casts of activations between the two dots.
    y = jnp.dot(w2T_ref[...], h, preferred_element_type=jnp.float32)
    o_ref[...] = jnp.maximum(y + b2_ref[...], 0.0).astype(o_ref.dtype)


def client_model_forward(x, w1, b1, w2, b2, *, tile_b=2048):
    """x: (B, F) f32.  w1: (F, 8), b1: (8,), w2: (8, 4), b2: (4,).

    Returns (B, 4) f32 == relu(relu(x @ w1 + b1) @ w2 + b2).
    """
    B, F = x.shape
    H1 = w1.shape[1]        # 8
    H2 = w2.shape[1]        # 4
    H2P = 8                 # pad fc2 output rows 4 -> 8 (full sublane group)

    # Batch tile on the lane axis: multiple of 128, capped at `tile_b`.
    TB = max(128, min(tile_b, _round_up(B, 128)))
    B_pad = _round_up(B, TB)
    grid = (B_pad // TB,)

    # --- wrapper-side layout plumbing (feature-major / batch on lanes) ---
    xT = jnp.zeros((F, B_pad), jnp.bfloat16).at[:, :B].set(
        x.astype(jnp.bfloat16).T)                       # (F, B_pad) bf16
    w1T = w1.astype(jnp.bfloat16).T                     # (8, F)  bf16
    b1c = b1.astype(jnp.float32).reshape(H1, 1)         # (8, 1)  f32
    w2Tp = jnp.zeros((H2P, H1), jnp.float32).at[:H2, :].set(
        w2.astype(jnp.float32).T)                       # (8, 8)  f32 (rows 4..7 = 0)
    b2c = jnp.zeros((H2P, 1), jnp.float32).at[:H2, :].set(
        b2.astype(jnp.float32).reshape(H2, 1))          # (8, 1)  f32

    cost = pl.CostEstimate(
        flops=2 * B_pad * (H1 * F + H2P * H1),
        transcendentals=0,
        bytes_accessed=(xT.size * 2 + w1T.size * 2
                        + (w2Tp.size + b1c.size + b2c.size) * 4
                        + H2P * B_pad * 4),
    )

    outT = pl.pallas_call(
        mlp_kernel,
        out_shape=jax.ShapeDtypeStruct((H2P, B_pad), jnp.float32),
        grid=grid,
        in_specs=[
            pl.BlockSpec((F, TB), lambda i: (0, i)),      # x tile (pipelined)
            pl.BlockSpec((H1, F), lambda i: (0, 0)),      # W1ᵀ  (resident)
            pl.BlockSpec((H1, 1), lambda i: (0, 0)),      # b1   (resident)
            pl.BlockSpec((H2P, H1), lambda i: (0, 0)),    # W2ᵀ  (resident)
            pl.BlockSpec((H2P, 1), lambda i: (0, 0)),     # b2   (resident)
        ],
        out_specs=pl.BlockSpec((H2P, TB), lambda i: (0, i)),
        compiler_params=pltpu.CompilerParams(
            dimension_semantics=("parallel",)),           # v7x: 2 TCs
        cost_estimate=cost,
    )(xT, w1T, b1c, w2Tp, b2c)

    # Drop padded output rows / padded batch columns, back to (B, 4).
    return outT[:H2, :B].T


def init_params(key, input_features):
    """Mimics PyTorch nn.Linear default init (U(-1/sqrt(fan_in), +))."""
    k1, k2, k3, k4 = jax.random.split(key, 4)
    bound1 = 1.0 / (input_features ** 0.5)
    bound2 = 1.0 / (8 ** 0.5)
    w1 = jax.random.uniform(k1, (input_features, 8), jnp.float32, -bound1, bound1)
    b1 = jax.random.uniform(k2, (8,), jnp.float32, -bound1, bound1)
    w2 = jax.random.uniform(k3, (8, 4), jnp.float32, -bound2, bound2)
    b2 = jax.random.uniform(k4, (4,), jnp.float32, -bound2, bound2)
    return w1, b1, w2, b2


if __name__ == "__main__":
    key = jax.random.PRNGKey(0)
    kx, kp = jax.random.split(key)

    batch = 4
    input_features = 10  # diabetes tabular features
    x = jax.random.normal(kx, (batch, input_features), jnp.float32)
    w1, b1, w2, b2 = init_params(kp, input_features)

    out = client_model_forward(x, w1, b1, w2, b2)
    out = jax.block_until_ready(out)

    # Reference (same semantics as the PyTorch forward), using the same bf16
    # rounding of x/W1 that the kernel feeds the MXU.
    xh = x.astype(jnp.bfloat16).astype(jnp.float32)
    w1h = w1.astype(jnp.bfloat16).astype(jnp.float32)
    h = jnp.maximum(xh @ w1h + b1[None, :], 0.0)
    ref = jnp.maximum(h @ w2 + b2[None, :], 0.0)

    assert out.shape == (batch, 4)
    assert jnp.allclose(out, ref, atol=1e-4, rtol=1e-4), (out, ref)

    print("KERNEL_OK")
</pallas_src>

<mosaic_0001>
module attributes {stable_mosaic.version = 11 : i64} {
  func.func @mlp_kernel(%arg0: i32, %arg1: memref<10x128xbf16, #tpu.memory_space<vmem>>, %arg2: memref<8x10xbf16, #tpu.memory_space<vmem>>, %arg3: memref<8x1xf32, #tpu.memory_space<vmem>>, %arg4: memref<8x8xf32, #tpu.memory_space<vmem>>, %arg5: memref<8x1xf32, #tpu.memory_space<vmem>>, %arg6: memref<8x128xf32, #tpu.memory_space<vmem>>) attributes {dimension_semantics = [#tpu.dimension_semantics<parallel>], iteration_bounds = array<i64: 1>, scalar_prefetch = 0 : i64, scratch_operands = 0 : i64, tpu.core_type = #tpu.core_type<tc>, window_params = [{transform_indices = @transform_0, window_bounds = array<i64: 10, 128>}, {pipeline_mode = #tpu.pipeline_mode<synchronous>, transform_indices = @transform_1, window_bounds = array<i64: 8, 10>}, {pipeline_mode = #tpu.pipeline_mode<synchronous>, transform_indices = @transform_2, window_bounds = array<i64: 8, 1>}, {pipeline_mode = #tpu.pipeline_mode<synchronous>, transform_indices = @transform_3, window_bounds = array<i64: 8, 8>}, {pipeline_mode = #tpu.pipeline_mode<synchronous>, transform_indices = @transform_4, window_bounds = array<i64: 8, 1>}, {transform_indices = @transform_5, window_bounds = array<i64: 8, 128>}]} {
    %c0 = arith.constant 0 : index
    %c0_0 = arith.constant 0 : index
    %0 = vector.load %arg2[%c0, %c0_0] : memref<8x10xbf16, #tpu.memory_space<vmem>>, vector<8x10xbf16>
    %c0_1 = arith.constant 0 : index
    %c0_2 = arith.constant 0 : index
    %1 = vector.load %arg1[%c0_1, %c0_2] : memref<10x128xbf16, #tpu.memory_space<vmem>>, vector<10x128xbf16>
    %cst = arith.constant dense<0.000000e+00> : vector<8x128xf32>
    %2 = tpu.matmul %0, %1, %cst {dimension_numbers = #tpu.dot_dimension_numbers<[1], [0], [0], [1], [0, 0, 1, 1], [], []>} : vector<8x10xbf16>, vector<10x128xbf16>, vector<8x128xf32> -> vector<8x128xf32>
    %c0_3 = arith.constant 0 : index
    %c0_4 = arith.constant 0 : index
    %3 = vector.load %arg3[%c0_3, %c0_4] : memref<8x1xf32, #tpu.memory_space<vmem>>, vector<8x1xf32>
    %4 = vector.broadcast %3 : vector<8x1xf32> to vector<8x128xf32>
    %5 = arith.addf %2, %4 : vector<8x128xf32>
    %cst_5 = arith.constant 0.000000e+00 : f32
    %6 = vector.broadcast %cst_5 : f32 to vector<8x128xf32>
    %7 = arith.maximumf %5, %6 : vector<8x128xf32>
    %c0_6 = arith.constant 0 : index
    %c0_7 = arith.constant 0 : index
    %8 = vector.load %arg4[%c0_6, %c0_7] : memref<8x8xf32, #tpu.memory_space<vmem>>, vector<8x8xf32>
    %cst_8 = arith.constant dense<0.000000e+00> : vector<8x128xf32>
    %9 = tpu.matmul %8, %7, %cst_8 {dimension_numbers = #tpu.dot_dimension_numbers<[1], [0], [0], [1], [0, 0, 1, 1], [], []>} : vector<8x8xf32>, vector<8x128xf32>, vector<8x128xf32> -> vector<8x128xf32>
    %c0_9 = arith.constant 0 : index
    %c0_10 = arith.constant 0 : index
    %10 = vector.load %arg5[%c0_9, %c0_10] : memref<8x1xf32, #tpu.memory_space<vmem>>, vector<8x1xf32>
    %11 = vector.broadcast %10 : vector<8x1xf32> to vector<8x128xf32>
    %12 = arith.addf %9, %11 : vector<8x128xf32>
    %cst_11 = arith.constant 0.000000e+00 : f32
    %13 = vector.broadcast %cst_11 : f32 to vector<8x128xf32>
    %14 = arith.maximumf %12, %13 : vector<8x128xf32>
    %c0_12 = arith.constant 0 : index
    %c0_13 = arith.constant 0 : index
    %15 = vector.load %arg6[%c0_12, %c0_13] : memref<8x128xf32, #tpu.memory_space<vmem>>, vector<8x128xf32>
    tpu.vector_store %arg6[%c0_12, %c0_13], %14 {strides = array<i32>} : memref<8x128xf32, #tpu.memory_space<vmem>>, vector<8x128xf32>,
    return
  }
  func.func @transform_0(%arg0: i32) -> (i32, i32) {
    %c0_i32 = arith.constant 0 : i32
    %c0_i32_0 = arith.constant 0 : i32
    return %c0_i32, %arg0 : i32, i32
  }
  func.func @transform_1(%arg0: i32) -> (i32, i32) {
    %c0_i32 = arith.constant 0 : i32
    %c0_i32_0 = arith.constant 0 : i32
    %c0_i32_1 = arith.constant 0 : i32
    return %c0_i32, %c0_i32_0 : i32, i32
  }
  func.func @transform_2(%arg0: i32) -> (i32, i32) {
    %c0_i32 = arith.constant 0 : i32
    %c0_i32_0 = arith.constant 0 : i32
    %c0_i32_1 = arith.constant 0 : i32
    return %c0_i32, %c0_i32_0 : i32, i32
  }
  func.func @transform_3(%arg0: i32) -> (i32, i32) {
    %c0_i32 = arith.constant 0 : i32
    %c0_i32_0 = arith.constant 0 : i32
    %c0_i32_1 = arith.constant 0 : i32
    return %c0_i32, %c0_i32_0 : i32, i32
  }
  func.func @transform_4(%arg0: i32) -> (i32, i32) {
    %c0_i32 = arith.constant 0 : i32
    %c0_i32_0 = arith.constant 0 : i32
    %c0_i32_1 = arith.constant 0 : i32
    return %c0_i32, %c0_i32_0 : i32, i32
  }
  func.func @transform_5(%arg0: i32) -> (i32, i32) {
    %c0_i32 = arith.constant 0 : i32
    %c0_i32_0 = arith.constant 0 : i32
    return %c0_i32, %arg0 : i32, i32
  }
}

</mosaic_0001>

<llo_original>
// kernel: tpu_custom_call.1
$region0: #{tpu_custom_call.1}
  #allocation0 [shape = 'u32[]', space=smem, size = 0x4, offset = 0x4, fixed_abs, tag = 'smem constant byte address 0x4 - core index']
  #allocation1 [shape = 'u32[72,128]{1,0:T(1,128)}', space=vmem, size = 0x9000, scoped, tag = 'internal scratch']
  %s0 = inlined_call_operand.vmem [shape: bf16[10,128], index: 0, kind: input, shape index: {}]
  %s1 = inlined_call_operand.hbm [shape: bf16[8,10], index: 1, kind: input, shape index: {}]
  %s2 = inlined_call_operand.vmem [shape: f32[8,1], index: 2, kind: input, shape index: {}]
  %s3 = inlined_call_operand.vmem [shape: f32[8,8], index: 3, kind: input, shape index: {}]
  %s4 = inlined_call_operand.vmem [shape: f32[8,1], index: 4, kind: input, shape index: {}]
  %s5 = inlined_call_operand.hbm [shape: f32[8,128], index: 5, kind: output, shape index: {}]
  %s6 = sld [smem:[#allocation0]]
  $region34: #{tpu_custom_call.1} parent=0
    _
  %s8 = ssub.s32 1, %s6
  %s9 = scalar_select 0, %s8, %s6
  $region1: #{tpu_custom_call.1} parent=0
    #allocation2 [shape = 'u8[2048]{0}', space=vmem, size = 0x800, scoped, tag = 'input window, operand 1, single buffered']
    #allocation3 [shape = 's32[1]{0}', space=sflag, size = 0x4, scoped, tag = 'scoped memory for tpu_custom_call.1']
    #allocation4 [shape = 's32[1]{0}', space=sflag, size = 0x4, scoped, tag = 'scoped memory for tpu_custom_call.1']
    #allocation5 [shape = 'u8[4096]{0}', space=vmem, size = 0x1000, scoped, tag = 'output window, operand 0, single buffered']
    %10 = vsyncpa [#allocation3], 0
    %11 = vsyncpa [#allocation4], 0
    // Predicated region
    $region2: #{tpu_custom_call.1} parent=1 // pred_check
      _
    $region3: #{tpu_custom_call.1} parent=1 // pred_check_branch
      %13 = sbr.rel (0) target = $region5
    $region4: #{tpu_custom_call.1} parent=1 // pred_region
      _
    $region5: #{tpu_custom_call.1} parent=1 // pred_fallthru
      _
    // Predicated region
    $region6: #{tpu_custom_call.1} parent=1 // pred_check
      _
    $region7: #{tpu_custom_call.1} parent=1 // pred_check_branch
      %15 = sbr.rel (0) target = $region9
    $region8: #{tpu_custom_call.1} parent=1 // pred_region
      %17 = vsyncadd [#allocation3], 0
      %s19 = sshll.u32 %s1, 4
      %s20 = int_to_ptr.hbm [resolvable:$true] %s19
      %s21 = sshll.u32 [#allocation2], 4
      %s22 = int_to_ptr.vmem [resolvable:$true] %s21
      %24 = dma.hbm_to_vmem [thread:$0]  %s20, 64, %s22, [#allocation3]
    $region9: #{tpu_custom_call.1} parent=1 // pred_fallthru
      _
    // Predicated region
    $region10: #{tpu_custom_call.1} parent=1 // pred_check
      _
    $region11: #{tpu_custom_call.1} parent=1 // pred_check_branch
      %26 = sbr.rel (0) target = $region13
    $region12: #{tpu_custom_call.1} parent=1 // pred_region
      _
    $region13: #{tpu_custom_call.1} parent=1 // pred_fallthru
      _
    // Predicated region
    $region14: #{tpu_custom_call.1} parent=1 // pred_check
      _
    $region15: #{tpu_custom_call.1} parent=1 // pred_check_branch
      %28 = sbr.rel (0) target = $region17
    $region16: #{tpu_custom_call.1} parent=1 // pred_region
      _
    $region17: #{tpu_custom_call.1} parent=1 // pred_fallthru
      _
    // Predicated region
    $region18: #{tpu_custom_call.1} parent=1 // pred_check
      _
    $region19: #{tpu_custom_call.1} parent=1 // pred_check_branch
      %30 = sbr.rel (0) target = $region21
    $region20: #{tpu_custom_call.1} parent=1 // pred_region
      _
    $region21: #{tpu_custom_call.1} parent=1 // pred_fallthru
      _
    // Predicated region
    $region22: #{tpu_custom_call.1} parent=1 // pred_check
      _
    $region23: #{tpu_custom_call.1} parent=1 // pred_check_branch
      %32 = sbr.rel (0) target = $region25
    $region24: #{tpu_custom_call.1} parent=1 // pred_region
      %34 = dma.done [#allocation3], 64
    $region25: #{tpu_custom_call.1} parent=1 // pred_fallthru
      _
    %v36 = vld [vmem:[#allocation2] sm:$0xf]
    %v37 = vld [vmem:[%s0] sm:$0xf]
    %v38 = vld [vmem:[%s0 + $0x4] sm:$0x1]
    %v39 = vld [vmem:[%s2] sm:$0xff]
    %41 = vset.pattern.permute.xlu0 0
    %42 = vperm.xlu0 %41, %v39
    %v43 = vpop.permute.xlu0 %42
    %v47 = vunpack.c.l.b16 %v37
    %v48 = vunpack.c.l.b16 %v38
    %v49 = vpack.c.b16 %v48, %v47
    %vm50 = vcmask 80896
    %v52 = vsel %vm50, %v36, 0
    %vm54 = vcmask 1044480
    %v56 = vsel %vm54, %v49, 0
    %58 = vmatpush.bf16.msra.mxu0 0
    %59 = vmatpush.bf16.msra.mxu0 0
    %60 = vmatpush.bf16.msra.mxu0 0
    %61 = vmatpush.bf16.msra.mxu0 0
    %62 = vmatpush.bf16.msra.mxu0 0
    %63 = vmatpush.bf16.msra.mxu0 0
    %64 = vmatpush.bf16.msra.mxu0 0
    %65 = vmatpush.bf16.msra.mxu0 %v56
    %66 = vmatmul.bf16.gmra.mxu0 %v52
    %v67 = vpop.f32.mrf.mxu0
    %v68 = vadd.f32 %v43, %v67
    %v69 = vpop.f32.mrf.mxu0
    %70 = vdwg.mxu0
    %v71 = vmax.f32 %v68, 0.0
    %v72 = vld [vmem:[%s3] sm:$0xff]
    %v73 = vld [vmem:[%s4] sm:$0xff]
    %75 = vset.pattern.permute.xlu0 0
    %76 = vperm.xlu0 %75, %v73
    %v77 = vpop.permute.xlu0 %76
    %vm79 = vcmask 64512
    %v81 = vsel %vm79, %v72, 0
    %83 = vmatpush.msra.mxu0 0.0
    %84 = vmatpush.msra.mxu0 0.0
    %85 = vmatpush.msra.mxu0 0.0
    %86 = vmatpush.msra.mxu0 0.0
    %87 = vmatpush.msra.mxu0 0.0
    %88 = vmatpush.msra.mxu0 0.0
    %89 = vmatpush.msra.mxu0 0.0
    %90 = vmatpush.msra.mxu0 0.0
    %91 = vmatpush.msra.mxu0 0.0
    %92 = vmatpush.msra.mxu0 0.0
    %93 = vmatpush.msra.mxu0 0.0
    %94 = vmatpush.msra.mxu0 0.0
    %95 = vmatpush.msra.mxu0 0.0
    %96 = vmatpush.msra.mxu0 0.0
    %97 = vmatpush.msra.mxu0 0.0
    %98 = vmatpush.msra.mxu0 %v71
    %99 = vmatmul.f32.gmra.mxu0 %v81
    %v100 = vpop.f32.mrf.mxu0
    %v101 = vadd.f32 %v77, %v100
    %102 = vdwg.mxu0
    %v103 = vmax.f32 %v101, 0.0
    %104 = vst [vmem:[#allocation5] sm:$0xff] %v103
    // Predicated region
    $region26: #{tpu_custom_call.1} parent=1 // pred_check
      _
    $region27: #{tpu_custom_call.1} parent=1 // pred_check_branch
      %106 = sbr.rel (0) target = $region29
    $region28: #{tpu_custom_call.1} parent=1 // pred_region
      %108 = vsyncadd [#allocation4], 0
      %s110 = sshll.u32 [#allocation5], 4
      %s111 = int_to_ptr.vmem [resolvable:$true] %s110
      %s112 = sshll.u32 %s5, 4
      %s113 = int_to_ptr.hbm [resolvable:$true] %s112
      %115 = dma.vmem_to_hbm [thread:$0]  %s111, 128, %s113, [#allocation4]
    $region29: #{tpu_custom_call.1} parent=1 // pred_fallthru
      _
    // Predicated region
    $region30: #{tpu_custom_call.1} parent=1 // pred_check
      _
    $region31: #{tpu_custom_call.1} parent=1 // pred_check_branch
      %117 = sbr.rel (0) target = $region33
    $region32: #{tpu_custom_call.1} parent=1 // pred_region
      %119 = dma.done [#allocation4], 128
    $region33: #{tpu_custom_call.1} parent=1 // pred_fallthru
      _
    %120 = vsyncpa [#allocation3], 1
    %121 = vsyncpa [#allocation4], 1

</llo_original>
